<compile_context>
chip_gen: v7x
topology: tpu7x:2x2x1
jax: 0.10.0
libtpu: 0.0.40
codegen_flags: <defaults>
</compile_context>

<pallas_src>
import functools

import jax
import jax.numpy as jnp
import numpy as np
from jax.experimental import pallas as pl
from jax.experimental.pallas import tpu as pltpu


# --------------------------------------------------------------------------
# Mask construction (create_masks from the MAF reference code, 'sequential')
# --------------------------------------------------------------------------
def create_masks(input_size, hidden_size, n_hidden):
    degrees = [np.arange(input_size)]
    for _ in range(n_hidden + 1):
        degrees.append(np.arange(hidden_size) % (input_size - 1))
    degrees.append(np.arange(input_size) % input_size - 1)

    masks = []
    for d0, d1 in zip(degrees[:-1], degrees[1:]):
        masks.append((d1[:, None] >= d0[None, :]).astype(np.float32))  # (out, in)
    return masks, degrees[0]


# --------------------------------------------------------------------------
# Pallas kernel: masked MLP (relu) + fused MoG head + per-component math.
# Batch is on the lane axis; components are 8-sublane row blocks.
# --------------------------------------------------------------------------
def _mademog_kernel(x_ref, w0_ref, b0_ref, w1_ref, b1_ref, w2_ref, b2_ref,
                    u_ref, ladj_ref, logr_ref, *, C, L):
    x = x_ref[...]                                                    # (L, TN)

    # hidden layers (masks already folded into the weights)
    h = jnp.dot(w0_ref[...], x, preferred_element_type=jnp.float32) + b0_ref[...]
    h = jnp.maximum(h, 0.0)                                           # (H, TN)
    h = jnp.dot(w1_ref[...], h, preferred_element_type=jnp.float32) + b1_ref[...]
    h = jnp.maximum(h, 0.0)                                           # (H, TN)

    # single fused head matmul; rows ordered [m | log_a | log_r], each head's
    # rows in (component, feature) order: row = head*C*L + c*L + l
    out = jnp.dot(w2_ref[...], h, preferred_element_type=jnp.float32) + b2_ref[...]
    # (3*C*L, TN)

    CL = C * L
    m    = out[0 * CL:1 * CL]                                         # (C*L, TN)
    loga = out[1 * CL:2 * CL]
    logr = out[2 * CL:3 * CL]

    # x replicated across components: one sublane concat of the same tile.
    x_rep = jnp.concatenate([x] * C, axis=0)                          # (C*L, TN)

    u_ref[...]    = (x_rep - m) * jnp.exp(-loga)
    ladj_ref[...] = -loga

    # logsumexp over the C components.  Each component is a static, 8-sublane-
    # aligned row block of a lane-dense tile, so this unrolled reduction is a
    # handful of full-vreg VPU/EUP ops (no lane shuffles, no broadcasts).
    mx = logr[0:L]
    for c in range(1, C):
        mx = jnp.maximum(mx, logr[c * L:(c + 1) * L])                 # (L, TN)
    s = jnp.exp(logr[0:L] - mx)
    for c in range(1, C):
        s = s + jnp.exp(logr[c * L:(c + 1) * L] - mx)
    lse = mx + jnp.log(s)                                             # (L, TN)
    logr_ref[...] = logr - jnp.concatenate([lse] * C, axis=0)


# --------------------------------------------------------------------------
# One-time parameter prep (hoisted out of the forward path):
#   * fold autoregressive masks into the weights
#   * permute the final layer's rows so heads come out as contiguous
#     (component-major, feature-minor) row blocks
# --------------------------------------------------------------------------
def prepare_params(params, *, n_components, input_size):
    C, L = n_components, input_size
    w0 = params["W0"] * params["mask0"]                               # (H, L)
    w1 = params["W1"] * params["mask1"]                               # (H, H)
    w2 = params["W2"] * params["mask2f"]                              # (3CL, H)

    # new row (head*C*L + c*L + l)  <-  old row (c*3L + head*L + l)
    h_i = np.arange(3)[:, None, None]
    c_i = np.arange(C)[None, :, None]
    l_i = np.arange(L)[None, None, :]
    perm = jnp.asarray((c_i * 3 * L + h_i * L + l_i).reshape(-1))

    return dict(
        w0=jnp.asarray(w0, jnp.float32),
        b0=jnp.asarray(params["b0"], jnp.float32)[:, None],           # (H, 1)
        w1=jnp.asarray(w1, jnp.float32),
        b1=jnp.asarray(params["b1"], jnp.float32)[:, None],
        w2=jnp.asarray(w2, jnp.float32)[perm, :],                     # (3CL, H)
        b2=jnp.asarray(params["b2"], jnp.float32)[perm][:, None],     # (3CL, 1)
    )


# --------------------------------------------------------------------------
# Forward wrapper: pad batch to a tile multiple, run the gridded kernel,
# transpose back to the module's (N, C, L) layout.
# --------------------------------------------------------------------------
@functools.partial(jax.jit, static_argnames=("n_components", "input_size", "tile_n"))
def mademog_forward(x, prep, *, n_components, input_size, tile_n=128):
    N, L = x.shape
    C = n_components
    H = prep["w0"].shape[0]
    CL = C * L

    n_tiles = pl.cdiv(N, tile_n)
    Np = n_tiles * tile_n
    xT = jnp.pad(x.astype(jnp.float32), ((0, Np - N), (0, 0))).T      # (L, Np)

    kernel = functools.partial(_mademog_kernel, C=C, L=L)
    full = lambda i: (0, 0)

    cost = pl.CostEstimate(
        flops=2 * Np * (L * H + H * H + H * 3 * CL),
        transcendentals=Np * (2 * CL + L),
        bytes_accessed=4 * (Np * L                                    # x
                            + H * (L + H + 3 * CL) + 2 * H + 3 * CL   # weights
                            + 3 * CL * Np),                           # outputs
    )

    u_t, ladj_t, logr_t = pl.pallas_call(
        kernel,
        out_shape=(
            jax.ShapeDtypeStruct((CL, Np), jnp.float32),
            jax.ShapeDtypeStruct((CL, Np), jnp.float32),
            jax.ShapeDtypeStruct((CL, Np), jnp.float32),
        ),
        grid_spec=pltpu.PrefetchScalarGridSpec(
            num_scalar_prefetch=0,
            grid=(n_tiles,),
            in_specs=[
                pl.BlockSpec((L, tile_n), lambda i: (0, i)),          # x tile
                pl.BlockSpec((H, L), full),                           # W0 (resident)
                pl.BlockSpec((H, 1), full),                           # b0
                pl.BlockSpec((H, H), full),                           # W1
                pl.BlockSpec((H, 1), full),                           # b1
                pl.BlockSpec((3 * CL, H), full),                      # fused head W
                pl.BlockSpec((3 * CL, 1), full),                      # fused head b
            ],
            out_specs=(
                pl.BlockSpec((CL, tile_n), lambda i: (0, i)),
                pl.BlockSpec((CL, tile_n), lambda i: (0, i)),
                pl.BlockSpec((CL, tile_n), lambda i: (0, i)),
            ),
        ),
        compiler_params=pltpu.CompilerParams(
            dimension_semantics=("parallel",)),
        cost_estimate=cost,
    )(xT, prep["w0"], prep["b0"], prep["w1"], prep["b1"], prep["w2"], prep["b2"])

    # (C*L, Np) -> (N, C, L); row index was c*L + l
    u    = u_t.T[:N].reshape(N, C, L)
    ladj = ladj_t.T[:N].reshape(N, C, L)
    logr = logr_t.T[:N].reshape(N, C, L)
    return u, ladj, logr


# --------------------------------------------------------------------------
# Pure-JAX reference (mirrors the PyTorch forward exactly)
# --------------------------------------------------------------------------
def mademog_ref(x, params, *, n_components, input_size):
    N = x.shape[0]
    L, C = input_size, n_components
    h = x @ (params["W0"] * params["mask0"]).T + params["b0"]
    h = jnp.maximum(h, 0.0)
    h = h @ (params["W1"] * params["mask1"]).T + params["b1"]
    h = jnp.maximum(h, 0.0)
    out = h @ (params["W2"] * params["mask2f"]).T + params["b2"]      # (N, 3CL)
    out3 = out.reshape(N, C, 3 * L)
    m, loga, logr = out3[..., :L], out3[..., L:2 * L], out3[..., 2 * L:]
    x_rep = jnp.tile(x, (1, C)).reshape(N, C, L)
    u = (x_rep - m) * jnp.exp(-loga)
    ladj = -loga
    logr_n = logr - jax.scipy.special.logsumexp(logr, axis=1, keepdims=True)
    return u, ladj, logr_n


# --------------------------------------------------------------------------
# Main
# --------------------------------------------------------------------------
if __name__ == "__main__":
    # small config consistent with the module; N deliberately not a multiple
    # of the 128-lane batch tile to exercise the padded multi-tile grid path.
    N, L, H, C, n_hidden = 200, 8, 32, 4, 1

    masks_np, _ = create_masks(L, H, n_hidden)
    mask0 = jnp.asarray(masks_np[0])                                  # (H, L)
    mask1 = jnp.asarray(masks_np[1])                                  # (H, H)
    mask2f = jnp.asarray(np.tile(masks_np[2], (C * 3, 1)))            # (3CL, H)

    # deterministic nn.Linear-style init: U(-1/sqrt(fan_in), 1/sqrt(fan_in))
    key = jax.random.PRNGKey(0)
    ks = jax.random.split(key, 7)

    def lin_init(kw, kb, out_dim, in_dim):
        bound = 1.0 / np.sqrt(in_dim)
        W = jax.random.uniform(kw, (out_dim, in_dim), jnp.float32, -bound, bound)
        b = jax.random.uniform(kb, (out_dim,), jnp.float32, -bound, bound)
        return W, b

    W0, b0 = lin_init(ks[0], ks[1], H, L)
    W1, b1 = lin_init(ks[2], ks[3], H, H)
    W2, b2 = lin_init(ks[4], ks[5], 3 * C * L, H)

    params = dict(W0=W0, b0=b0, W1=W1, b1=b1, W2=W2, b2=b2,
                  mask0=mask0, mask1=mask1, mask2f=mask2f)

    x = jax.random.normal(ks[6], (N, L), jnp.float32)

    # one-time parameter prep (hoisted out of the forward path)
    prep = jax.tree_util.tree_map(jax.block_until_ready,
                                  prepare_params(params, n_components=C, input_size=L))

    u, ladj, logr = mademog_forward(x, prep, n_components=C, input_size=L)
    jax.block_until_ready((u, ladj, logr))

    u_r, ladj_r, logr_r = mademog_ref(x, params, n_components=C, input_size=L)
    np.testing.assert_allclose(np.asarray(u), np.asarray(u_r), rtol=1e-3, atol=1e-3)
    np.testing.assert_allclose(np.asarray(ladj), np.asarray(ladj_r), rtol=1e-3, atol=1e-3)
    np.testing.assert_allclose(np.asarray(logr), np.asarray(logr_r), rtol=1e-3, atol=1e-3)

    print("KERNEL_OK")
</pallas_src>

<mosaic_0001>
module attributes {stable_mosaic.version = 11 : i64} {
  func.func @_mademog_kernel(%arg0: i32, %arg1: memref<8x128xf32, #tpu.memory_space<vmem>>, %arg2: memref<32x8xf32, #tpu.memory_space<vmem>>, %arg3: memref<32x1xf32, #tpu.memory_space<vmem>>, %arg4: memref<32x32xf32, #tpu.memory_space<vmem>>, %arg5: memref<32x1xf32, #tpu.memory_space<vmem>>, %arg6: memref<96x32xf32, #tpu.memory_space<vmem>>, %arg7: memref<96x1xf32, #tpu.memory_space<vmem>>, %arg8: memref<32x128xf32, #tpu.memory_space<vmem>>, %arg9: memref<32x128xf32, #tpu.memory_space<vmem>>, %arg10: memref<32x128xf32, #tpu.memory_space<vmem>>) attributes {dimension_semantics = [#tpu.dimension_semantics<parallel>], iteration_bounds = array<i64: 2>, scalar_prefetch = 0 : i64, scratch_operands = 0 : i64, tpu.core_type = #tpu.core_type<tc>, window_params = [{transform_indices = @transform_0, window_bounds = array<i64: 8, 128>}, {pipeline_mode = #tpu.pipeline_mode<synchronous>, transform_indices = @transform_1, window_bounds = array<i64: 32, 8>}, {pipeline_mode = #tpu.pipeline_mode<synchronous>, transform_indices = @transform_2, window_bounds = array<i64: 32, 1>}, {pipeline_mode = #tpu.pipeline_mode<synchronous>, transform_indices = @transform_3, window_bounds = array<i64: 32, 32>}, {pipeline_mode = #tpu.pipeline_mode<synchronous>, transform_indices = @transform_4, window_bounds = array<i64: 32, 1>}, {pipeline_mode = #tpu.pipeline_mode<synchronous>, transform_indices = @transform_5, window_bounds = array<i64: 96, 32>}, {pipeline_mode = #tpu.pipeline_mode<synchronous>, transform_indices = @transform_6, window_bounds = array<i64: 96, 1>}, {transform_indices = @transform_7, window_bounds = array<i64: 32, 128>}, {transform_indices = @transform_8, window_bounds = array<i64: 32, 128>}, {transform_indices = @transform_9, window_bounds = array<i64: 32, 128>}]} {
    %c0 = arith.constant 0 : index
    %c0_0 = arith.constant 0 : index
    %0 = vector.load %arg1[%c0, %c0_0] : memref<8x128xf32, #tpu.memory_space<vmem>>, vector<8x128xf32>
    %c0_1 = arith.constant 0 : index
    %c0_2 = arith.constant 0 : index
    %1 = vector.load %arg2[%c0_1, %c0_2] : memref<32x8xf32, #tpu.memory_space<vmem>>, vector<32x8xf32>
    %cst = arith.constant dense<0.000000e+00> : vector<32x128xf32>
    %2 = tpu.matmul %1, %0, %cst {dimension_numbers = #tpu.dot_dimension_numbers<[1], [0], [0], [1], [0, 0, 1, 1], [], []>} : vector<32x8xf32>, vector<8x128xf32>, vector<32x128xf32> -> vector<32x128xf32>
    %c0_3 = arith.constant 0 : index
    %c0_4 = arith.constant 0 : index
    %3 = vector.load %arg3[%c0_3, %c0_4] : memref<32x1xf32, #tpu.memory_space<vmem>>, vector<32x1xf32>
    %4 = vector.broadcast %3 : vector<32x1xf32> to vector<32x128xf32>
    %5 = arith.addf %2, %4 : vector<32x128xf32>
    %cst_5 = arith.constant 0.000000e+00 : f32
    %6 = vector.broadcast %cst_5 : f32 to vector<32x128xf32>
    %7 = arith.maximumf %5, %6 : vector<32x128xf32>
    %c0_6 = arith.constant 0 : index
    %c0_7 = arith.constant 0 : index
    %8 = vector.load %arg4[%c0_6, %c0_7] : memref<32x32xf32, #tpu.memory_space<vmem>>, vector<32x32xf32>
    %cst_8 = arith.constant dense<0.000000e+00> : vector<32x128xf32>
    %9 = tpu.matmul %8, %7, %cst_8 {dimension_numbers = #tpu.dot_dimension_numbers<[1], [0], [0], [1], [0, 0, 1, 1], [], []>} : vector<32x32xf32>, vector<32x128xf32>, vector<32x128xf32> -> vector<32x128xf32>
    %c0_9 = arith.constant 0 : index
    %c0_10 = arith.constant 0 : index
    %10 = vector.load %arg5[%c0_9, %c0_10] : memref<32x1xf32, #tpu.memory_space<vmem>>, vector<32x1xf32>
    %11 = vector.broadcast %10 : vector<32x1xf32> to vector<32x128xf32>
    %12 = arith.addf %9, %11 : vector<32x128xf32>
    %cst_11 = arith.constant 0.000000e+00 : f32
    %13 = vector.broadcast %cst_11 : f32 to vector<32x128xf32>
    %14 = arith.maximumf %12, %13 : vector<32x128xf32>
    %c0_12 = arith.constant 0 : index
    %c0_13 = arith.constant 0 : index
    %15 = vector.load %arg6[%c0_12, %c0_13] : memref<96x32xf32, #tpu.memory_space<vmem>>, vector<96x32xf32>
    %cst_14 = arith.constant dense<0.000000e+00> : vector<96x128xf32>
    %16 = tpu.matmul %15, %14, %cst_14 {dimension_numbers = #tpu.dot_dimension_numbers<[1], [0], [0], [1], [0, 0, 1, 1], [], []>} : vector<96x32xf32>, vector<32x128xf32>, vector<96x128xf32> -> vector<96x128xf32>
    %c0_15 = arith.constant 0 : index
    %c0_16 = arith.constant 0 : index
    %17 = vector.load %arg7[%c0_15, %c0_16] : memref<96x1xf32, #tpu.memory_space<vmem>>, vector<96x1xf32>
    %18 = vector.broadcast %17 : vector<96x1xf32> to vector<96x128xf32>
    %19 = arith.addf %16, %18 : vector<96x128xf32>
    %20 = vector.extract_strided_slice %19 {offsets = [0, 0], sizes = [32, 128], strides = [1, 1]} : vector<96x128xf32> to vector<32x128xf32>
    %21 = vector.extract_strided_slice %19 {offsets = [32, 0], sizes = [32, 128], strides = [1, 1]} : vector<96x128xf32> to vector<32x128xf32>
    %22 = vector.extract_strided_slice %19 {offsets = [64, 0], sizes = [32, 128], strides = [1, 1]} : vector<96x128xf32> to vector<32x128xf32>
    %23 = tpu.concatenate %0, %0, %0, %0 in 0 : vector<8x128xf32>, vector<8x128xf32>, vector<8x128xf32>, vector<8x128xf32> -> vector<32x128xf32>
    %24 = arith.subf %23, %20 : vector<32x128xf32>
    %cst_17 = arith.constant 0.000000e+00 : f32
    %25 = vector.broadcast %cst_17 : f32 to vector<32x128xf32>
    %26 = arith.subf %25, %21 : vector<32x128xf32>
    %27 = math.exp %26 : vector<32x128xf32>
    %28 = arith.mulf %24, %27 : vector<32x128xf32>
    %c0_18 = arith.constant 0 : index
    %c0_19 = arith.constant 0 : index
    %29 = vector.load %arg8[%c0_18, %c0_19] : memref<32x128xf32, #tpu.memory_space<vmem>>, vector<32x128xf32>
    tpu.vector_store %arg8[%c0_18, %c0_19], %28 {strides = array<i32>} : memref<32x128xf32, #tpu.memory_space<vmem>>, vector<32x128xf32>,
    %cst_20 = arith.constant 0.000000e+00 : f32
    %30 = vector.broadcast %cst_20 : f32 to vector<32x128xf32>
    %31 = arith.subf %30, %21 : vector<32x128xf32>
    %c0_21 = arith.constant 0 : index
    %c0_22 = arith.constant 0 : index
    %32 = vector.load %arg9[%c0_21, %c0_22] : memref<32x128xf32, #tpu.memory_space<vmem>>, vector<32x128xf32>
    tpu.vector_store %arg9[%c0_21, %c0_22], %31 {strides = array<i32>} : memref<32x128xf32, #tpu.memory_space<vmem>>, vector<32x128xf32>,
    %33 = vector.extract_strided_slice %22 {offsets = [0, 0], sizes = [8, 128], strides = [1, 1]} : vector<32x128xf32> to vector<8x128xf32>
    %34 = vector.extract_strided_slice %22 {offsets = [8, 0], sizes = [8, 128], strides = [1, 1]} : vector<32x128xf32> to vector<8x128xf32>
    %35 = arith.maximumf %33, %34 : vector<8x128xf32>
    %36 = vector.extract_strided_slice %22 {offsets = [16, 0], sizes = [8, 128], strides = [1, 1]} : vector<32x128xf32> to vector<8x128xf32>
    %37 = arith.maximumf %35, %36 : vector<8x128xf32>
    %38 = vector.extract_strided_slice %22 {offsets = [24, 0], sizes = [8, 128], strides = [1, 1]} : vector<32x128xf32> to vector<8x128xf32>
    %39 = arith.maximumf %37, %38 : vector<8x128xf32>
    %40 = vector.extract_strided_slice %22 {offsets = [0, 0], sizes = [8, 128], strides = [1, 1]} : vector<32x128xf32> to vector<8x128xf32>
    %41 = arith.subf %40, %39 : vector<8x128xf32>
    %42 = math.exp %41 : vector<8x128xf32>
    %43 = vector.extract_strided_slice %22 {offsets = [8, 0], sizes = [8, 128], strides = [1, 1]} : vector<32x128xf32> to vector<8x128xf32>
    %44 = arith.subf %43, %39 : vector<8x128xf32>
    %45 = math.exp %44 : vector<8x128xf32>
    %46 = arith.addf %42, %45 : vector<8x128xf32>
    %47 = vector.extract_strided_slice %22 {offsets = [16, 0], sizes = [8, 128], strides = [1, 1]} : vector<32x128xf32> to vector<8x128xf32>
    %48 = arith.subf %47, %39 : vector<8x128xf32>
    %49 = math.exp %48 : vector<8x128xf32>
    %50 = arith.addf %46, %49 : vector<8x128xf32>
    %51 = vector.extract_strided_slice %22 {offsets = [24, 0], sizes = [8, 128], strides = [1, 1]} : vector<32x128xf32> to vector<8x128xf32>
    %52 = arith.subf %51, %39 : vector<8x128xf32>
    %53 = math.exp %52 : vector<8x128xf32>
    %54 = arith.addf %50, %53 : vector<8x128xf32>
    %55 = math.log %54 : vector<8x128xf32>
    %56 = arith.addf %39, %55 : vector<8x128xf32>
    %57 = tpu.concatenate %56, %56, %56, %56 in 0 : vector<8x128xf32>, vector<8x128xf32>, vector<8x128xf32>, vector<8x128xf32> -> vector<32x128xf32>
    %58 = arith.subf %22, %57 : vector<32x128xf32>
    %c0_23 = arith.constant 0 : index
    %c0_24 = arith.constant 0 : index
    %59 = vector.load %arg10[%c0_23, %c0_24] : memref<32x128xf32, #tpu.memory_space<vmem>>, vector<32x128xf32>
    tpu.vector_store %arg10[%c0_23, %c0_24], %58 {strides = array<i32>} : memref<32x128xf32, #tpu.memory_space<vmem>>, vector<32x128xf32>,
    return
  }
  func.func @transform_0(%arg0: i32) -> (i32, i32) {
    %c0_i32 = arith.constant 0 : i32
    %c0_i32_0 = arith.constant 0 : i32
    return %c0_i32, %arg0 : i32, i32
  }
  func.func @transform_1(%arg0: i32) -> (i32, i32) {
    %c0_i32 = arith.constant 0 : i32
    %c0_i32_0 = arith.constant 0 : i32
    %c0_i32_1 = arith.constant 0 : i32
    return %c0_i32, %c0_i32_0 : i32, i32
  }
  func.func @transform_2(%arg0: i32) -> (i32, i32) {
    %c0_i32 = arith.constant 0 : i32
    %c0_i32_0 = arith.constant 0 : i32
    %c0_i32_1 = arith.constant 0 : i32
    return %c0_i32, %c0_i32_0 : i32, i32
  }
  func.func @transform_3(%arg0: i32) -> (i32, i32) {
    %c0_i32 = arith.constant 0 : i32
    %c0_i32_0 = arith.constant 0 : i32
    %c0_i32_1 = arith.constant 0 : i32
    return %c0_i32, %c0_i32_0 : i32, i32
  }
  func.func @transform_4(%arg0: i32) -> (i32, i32) {
    %c0_i32 = arith.constant 0 : i32
    %c0_i32_0 = arith.constant 0 : i32
    %c0_i32_1 = arith.constant 0 : i32
    return %c0_i32, %c0_i32_0 : i32, i32
  }
  func.func @transform_5(%arg0: i32) -> (i32, i32) {
    %c0_i32 = arith.constant 0 : i32
    %c0_i32_0 = arith.constant 0 : i32
    %c0_i32_1 = arith.constant 0 : i32
    return %c0_i32, %c0_i32_0 : i32, i32
  }
  func.func @transform_6(%arg0: i32) -> (i32, i32) {
    %c0_i32 = arith.constant 0 : i32
    %c0_i32_0 = arith.constant 0 : i32
    %c0_i32_1 = arith.constant 0 : i32
    return %c0_i32, %c0_i32_0 : i32, i32
  }
  func.func @transform_7(%arg0: i32) -> (i32, i32) {
    %c0_i32 = arith.constant 0 : i32
    %c0_i32_0 = arith.constant 0 : i32
    return %c0_i32, %arg0 : i32, i32
  }
  func.func @transform_8(%arg0: i32) -> (i32, i32) {
    %c0_i32 = arith.constant 0 : i32
    %c0_i32_0 = arith.constant 0 : i32
    return %c0_i32, %arg0 : i32, i32
  }
  func.func @transform_9(%arg0: i32) -> (i32, i32) {
    %c0_i32 = arith.constant 0 : i32
    %c0_i32_0 = arith.constant 0 : i32
    return %c0_i32, %arg0 : i32, i32
  }
}

</mosaic_0001>

<llo_original>
// kernel: mademog_forward.1
$region0: #{mademog_forward.1}
  #allocation0 [shape = 'u32[]', space=smem, size = 0x4, offset = 0x4, fixed_abs, tag = 'smem constant byte address 0x4 - core index']
  #allocation1 [shape = 'u32[144,128]{1,0:T(1,128)}', space=vmem, size = 0x12000, scoped, tag = 'internal scratch']
  %s0 = inlined_call_operand.vmem [shape: f32[8,256], index: 0, kind: input, shape index: {}]
  %s1 = inlined_call_operand.vmem [shape: f32[32,8], index: 1, kind: input, shape index: {}]
  %s2 = inlined_call_operand.vmem [shape: f32[32,1], index: 2, kind: input, shape index: {}]
  %s3 = inlined_call_operand.vmem [shape: f32[32,32], index: 3, kind: input, shape index: {}]
  %s4 = inlined_call_operand.vmem [shape: f32[32,1], index: 4, kind: input, shape index: {}]
  %s5 = inlined_call_operand.vmem [shape: f32[96,32], index: 5, kind: input, shape index: {}]
  %s6 = inlined_call_operand.vmem [shape: f32[96,1], index: 6, kind: input, shape index: {}]
  %s7 = inlined_call_operand.vmem [shape: f32[32,256], index: 7, kind: output, shape index: {0}]
  %s8 = inlined_call_operand.vmem [shape: f32[32,256], index: 8, kind: output, shape index: {1}]
  %s9 = inlined_call_operand.vmem [shape: f32[32,256], index: 9, kind: output, shape index: {2}]
  %10 = xla_tuple %s7, %s8, %s9
  %s11 = sld [smem:[#allocation0]]
  $region179: #{mademog_forward.1} parent=0
    _
  %s13 = ssub.s32 1, %s11
  %s14 = scalar_select 0, %s13, %s11
  $region1: #{mademog_forward.1} parent=0
    #allocation2 [shape = 'u8[32768]{0}', space=vmem, size = 0x8000, scoped, tag = 'output window, operand 0']
    #allocation3 [shape = 'u8[32768]{0}', space=vmem, size = 0x8000, scoped, tag = 'output window, operand 1']
    #allocation4 [shape = 'u8[32768]{0}', space=vmem, size = 0x8000, scoped, tag = 'output window, operand 2']
    loop: start=0, step=1, limit=4
    $region2: #{mademog_forward.1} parent=1 // loop_pre_header
      _
    $region3: #{mademog_forward.1} parent=1 // loop_header
      %s16 = sphi 0, %s20
      %p17 = scmp.ge.s32.totalorder %s16, 4
      %s26 = sphi 0, %s28
      %s29 = sphi 0, %s26
      %s30 = sphi 0, %s29
      %s46 = sphi 0, %s30
      %s50 = sphi 0, %s50
      %s52 = sphi 0, %s50
      %s53 = sphi 0, %s52
      %s67 = sphi 0, %s53
      %s71 = sphi 0, %s71
      %s73 = sphi 0, %s71
      %s74 = sphi 0, %s73
      %s88 = sphi 0, %s74
      %s92 = sphi 0, %s92
      %s94 = sphi 0, %s92
      %s95 = sphi 0, %s94
      %s109 = sphi 0, %s95
      %s113 = sphi 0, %s113
      %s115 = sphi 0, %s113
      %s116 = sphi 0, %s115
      %s130 = sphi 0, %s116
      %s134 = sphi 0, %s134
      %s136 = sphi 0, %s134
      %s137 = sphi 0, %s136
      %s151 = sphi 0, %s137
      %s155 = sphi 0, %s155
      %s157 = sphi 0, %s155
      %s158 = sphi 0, %s157
      %s172 = sphi 0, %s158
      %s178 = sphi 0, %s180
      %s181 = sphi 0, %s178
      %s182 = sphi 0, %s181
      %s198 = sphi 0, %s182
      %s204 = sphi 0, %s206
      %s207 = sphi 0, %s204
      %s208 = sphi 0, %s207
      %s224 = sphi 0, %s208
      %s230 = sphi 0, %s232
      %s233 = sphi 0, %s230
      %s234 = sphi 0, %s233
      %s250 = sphi 0, %s234
    $region4: #{mademog_forward.1} parent=1 // loop_header_branch
      %19 = sbr.rel (%p17) target = $region8
    $region5: #{mademog_forward.1} parent=1 // loop_body
      %s21 = ssub.s32 %s16, 1
      %s22 = ssub.s32 %s16, 2
      %s23 = sadd.s32 %s16, 1
      %s24 = ssub.s32 %s16, %s23
      %p25 = scmp.eq.s32.totalorder %s24, 0
      %s27 = sadd.s32 %s26, 1
      %s28 = scalar_select %p25, %s26, %s27
      %p31 = pneg %p25
      %p32 = scmp.eq.s32.totalorder %s16, 1
      %p33 = por %p31, %p32
      %p34 = scmp.ne.s32.totalorder %s26, %s29
      %p35 = scmp.eq.s32.totalorder %s16, 0
      %p36 = por %p34, %p35
      %p37 = scmp.ne.s32.totalorder %s26, %s29
      %p38 = scmp.eq.s32.totalorder %s21, 1
      %p39 = por %p37, %p38
      %p40 = scmp.ne.s32.totalorder %s29, %s30
      %p41 = scmp.eq.s32.totalorder %s21, 0
      %p42 = por %p40, %p41
      %p43 = scmp.ne.s32.totalorder %s29, %s30
      %p44 = scmp.eq.s32.totalorder %s22, 1
      %p45 = por %p43, %p44
      %p47 = scmp.ne.s32.totalorder %s30, %s46
      %p48 = scmp.eq.s32.totalorder %s22, 0
      %p49 = por %p47, %p48
      %s51 = sadd.s32 %s50, 1
      %p54 = scmp.eq.s32.totalorder %s16, 1
      %p55 = scmp.ne.s32.totalorder %s50, %s52
      %p56 = scmp.eq.s32.totalorder %s16, 0
      %p57 = por %p55, %p56
      %p58 = scmp.ne.s32.totalorder %s50, %s52
      %p59 = scmp.eq.s32.totalorder %s21, 1
      %p60 = por %p58, %p59
      %p61 = scmp.ne.s32.totalorder %s52, %s53
      %p62 = scmp.eq.s32.totalorder %s21, 0
      %p63 = por %p61, %p62
      %p64 = scmp.ne.s32.totalorder %s52, %s53
      %p65 = scmp.eq.s32.totalorder %s22, 1
      %p66 = por %p64, %p65
      %p68 = scmp.ne.s32.totalorder %s53, %s67
      %p69 = scmp.eq.s32.totalorder %s22, 0
      %p70 = por %p68, %p69
      %s72 = sadd.s32 %s71, 1
      %p75 = scmp.eq.s32.totalorder %s16, 1
      %p76 = scmp.ne.s32.totalorder %s71, %s73
      %p77 = scmp.eq.s32.totalorder %s16, 0
      %p78 = por %p76, %p77
      %p79 = scmp.ne.s32.totalorder %s71, %s73
      %p80 = scmp.eq.s32.totalorder %s21, 1
      %p81 = por %p79, %p80
      %p82 = scmp.ne.s32.totalorder %s73, %s74
      %p83 = scmp.eq.s32.totalorder %s21, 0
      %p84 = por %p82, %p83
      %p85 = scmp.ne.s32.totalorder %s73, %s74
      %p86 = scmp.eq.s32.totalorder %s22, 1
      %p87 = por %p85, %p86
      %p89 = scmp.ne.s32.totalorder %s74, %s88
      %p90 = scmp.eq.s32.totalorder %s22, 0
      %p91 = por %p89, %p90
      %s93 = sadd.s32 %s92, 1
      %p96 = scmp.eq.s32.totalorder %s16, 1
      %p97 = scmp.ne.s32.totalorder %s92, %s94
      %p98 = scmp.eq.s32.totalorder %s16, 0
      %p99 = por %p97, %p98
      %p100 = scmp.ne.s32.totalorder %s92, %s94
      %p101 = scmp.eq.s32.totalorder %s21, 1
      %p102 = por %p100, %p101
      %p103 = scmp.ne.s32.totalorder %s94, %s95
      %p104 = scmp.eq.s32.totalorder %s21, 0
      %p105 = por %p103, %p104
      %p106 = scmp.ne.s32.totalorder %s94, %s95
      %p107 = scmp.eq.s32.totalorder %s22, 1
      %p108 = por %p106, %p107
      %p110 = scmp.ne.s32.totalorder %s95, %s109
      %p111 = scmp.eq.s32.totalorder %s22, 0
      %p112 = por %p110, %p111
      %s114 = sadd.s32 %s113, 1
      %p117 = scmp.eq.s32.totalorder %s16, 1
      %p118 = scmp.ne.s32.totalorder %s113, %s115
      %p119 = scmp.eq.s32.totalorder %s16, 0
      %p120 = por %p118, %p119
      %p121 = scmp.ne.s32.totalorder %s113, %s115
      %p122 = scmp.eq.s32.totalorder %s21, 1
      %p123 = por %p121, %p122
      %p124 = scmp.ne.s32.totalorder %s115, %s116
      %p125 = scmp.eq.s32.totalorder %s21, 0
      %p126 = por %p124, %p125
      %p127 = scmp.ne.s32.totalorder %s115, %s116
      %p128 = scmp.eq.s32.totalorder %s22, 1
      %p129 = por %p127, %p128
      %p131 = scmp.ne.s32.totalorder %s116, %s130
      %p132 = scmp.eq.s32.totalorder %s22, 0
      %p133 = por %p131, %p132
      %s135 = sadd.s32 %s134, 1
      %p138 = scmp.eq.s32.totalorder %s16, 1
      %p139 = scmp.ne.s32.totalorder %s134, %s136
      %p140 = scmp.eq.s32.totalorder %s16, 0
      %p141 = por %p139, %p140
      %p142 = scmp.ne.s32.totalorder %s134, %s136
      %p143 = scmp.eq.s32.totalorder %s21, 1
      %p144 = por %p142, %p143
      %p145 = scmp.ne.s32.totalorder %s136, %s137
      %p146 = scmp.eq.s32.totalorder %s21, 0
      %p147 = por %p145, %p146
      %p148 = scmp.ne.s32.totalorder %s136, %s137
      %p149 = scmp.eq.s32.totalorder %s22, 1
      %p150 = por %p148, %p149
      %p152 = scmp.ne.s32.totalorder %s137, %s151
      %p153 = scmp.eq.s32.totalorder %s22, 0
      %p154 = por %p152, %p153
      %s156 = sadd.s32 %s155, 1
      %p159 = scmp.eq.s32.totalorder %s16, 1
      %p160 = scmp.ne.s32.totalorder %s155, %s157
      %p161 = scmp.eq.s32.totalorder %s16, 0
      %p162 = por %p160, %p161
      %p163 = scmp.ne.s32.totalorder %s155, %s157
      %p164 = scmp.eq.s32.totalorder %s21, 1
      %p165 = por %p163, %p164
      %p166 = scmp.ne.s32.totalorder %s157, %s158
      %p167 = scmp.eq.s32.totalorder %s21, 0
      %p168 = por %p166, %p167
      %p169 = scmp.ne.s32.totalorder %s157, %s158
      %p170 = scmp.eq.s32.totalorder %s22, 1
      %p171 = por %p169, %p170
      %p173 = scmp.ne.s32.totalorder %s158, %s172
      %p174 = scmp.eq.s32.totalorder %s22, 0
      %p175 = por %p173, %p174
      %s176 = ssub.s32 %s16, %s23
      %p177 = scmp.eq.s32.totalorder %s176, 0
      %s179 = sadd.s32 %s178, 1
      %s180 = scalar_select %p177, %s178, %s179
      %p183 = pneg %p177
      %p184 = scmp.eq.s32.totalorder %s16, 1
      %p185 = por %p183, %p184
      %p186 = scmp.ne.s32.totalorder %s178, %s181
      %p187 = scmp.eq.s32.totalorder %s16, 0
      %p188 = por %p186, %p187
      %p189 = scmp.ne.s32.totalorder %s178, %s181
      %p190 = scmp.eq.s32.totalorder %s21, 1
      %p191 = por %p189, %p190
      %p192 = scmp.ne.s32.totalorder %s181, %s182
      %p193 = scmp.eq.s32.totalorder %s21, 0
      %p194 = por %p192, %p193
      %p195 = scmp.ne.s32.totalorder %s181, %s182
      %p196 = scmp.eq.s32.totalorder %s22, 1
      %p197 = por %p195, %p196
      %p199 = scmp.ne.s32.totalorder %s182, %s198
      %p200 = scmp.eq.s32.totalorder %s22, 0
      %p201 = por %p199, %p200
      %s202 = ssub.s32 %s16, %s23
      %p203 = scmp.eq.s32.totalorder %s202, 0
      %s205 = sadd.s32 %s204, 1
      %s206 = scalar_select %p203, %s204, %s205
      %p209 = pneg %p203
      %p210 = scmp.eq.s32.totalorder %s16, 1
      %p211 = por %p209, %p210
      %p212 = scmp.ne.s32.totalorder %s204, %s207
      %p213 = scmp.eq.s32.totalorder %s16, 0
      %p214 = por %p212, %p213
      %p215 = scmp.ne.s32.totalorder %s204, %s207
      %p216 = scmp.eq.s32.totalorder %s21, 1
      %p217 = por %p215, %p216
      %p218 = scmp.ne.s32.totalorder %s207, %s208
      %p219 = scmp.eq.s32.totalorder %s21, 0
      %p220 = por %p218, %p219
      %p221 = scmp.ne.s32.totalorder %s207, %s208
      %p222 = scmp.eq.s32.totalorder %s22, 1
      %p223 = por %p221, %p222
      %p225 = scmp.ne.s32.totalorder %s208, %s224
      %p226 = scmp.eq.s32.totalorder %s22, 0
      %p227 = por %p225, %p226
      %s228 = ssub.s32 %s16, %s23
      %p229 = scmp.eq.s32.totalorder %s228, 0
      %s231 = sadd.s32 %s230, 1
      %s232 = scalar_select %p229, %s230, %s231
      %p235 = pneg %p229
      %p236 = scmp.eq.s32.totalorder %s16, 1
      %p237 = por %p235, %p236
      %p238 = scmp.ne.s32.totalorder %s230, %s233
      %p239 = scmp.eq.s32.totalorder %s16, 0
      %p240 = por %p238, %p239
      %p241 = scmp.ne.s32.totalorder %s230, %s233
      %p242 = scmp.eq.s32.totalorder %s21, 1
      %p243 = por %p241, %p242
      %p244 = scmp.ne.s32.totalorder %s233, %s234
      %p245 = scmp.eq.s32.totalorder %s21, 0
      %p246 = por %p244, %p245
      %p247 = scmp.ne.s32.totalorder %s233, %s234
      %p248 = scmp.eq.s32.totalorder %s22, 1
      %p249 = por %p247, %p248
      %p251 = scmp.ne.s32.totalorder %s234, %s250
      %p252 = scmp.eq.s32.totalorder %s22, 0
      %p253 = por %p251, %p252
      %p254 = scmp.le.s32.totalorder 1, %s16
      %p255 = scmp.lt.s32.totalorder %s16, 3
      %p256 = pnand %p254, %p255
      %p257 = pneg %p256
      // Predicated region
      $region9: #{mademog_forward.1} parent=5 // pred_check
        _
      $region10: #{mademog_forward.1} parent=5 // pred_check_branch
        %259 = sbr.rel (%p256) target = $region12
      $region11: #{mademog_forward.1} parent=5 // pred_region
        %s260 = ssub.s32 %s16, 1
        // Predicated region
        $region13: #{mademog_forward.1} parent=11 // pred_check
          %p261 = pneg %p63
        $region14: #{mademog_forward.1} parent=11 // pred_check_branch
          %263 = sbr.rel (%p261) target = $region16
        $region15: #{mademog_forward.1} parent=11 // pred_region
          _
        $region16: #{mademog_forward.1} parent=11 // pred_fallthru
          _
        // Predicated region
        $region17: #{mademog_forward.1} parent=11 // pred_check
          %p264 = pneg %p84
        $region18: #{mademog_forward.1} parent=11 // pred_check_branch
          %266 = sbr.rel (%p264) target = $region20
        $region19: #{mademog_forward.1} parent=11 // pred_region
          _
        $region20: #{mademog_forward.1} parent=11 // pred_fallthru
          _
        // Predicated region
        $region21: #{mademog_forward.1} parent=11 // pred_check
          %p267 = pneg %p105
        $region22: #{mademog_forward.1} parent=11 // pred_check_branch
          %269 = sbr.rel (%p267) target = $region24
        $region23: #{mademog_forward.1} parent=11 // pred_region
          _
        $region24: #{mademog_forward.1} parent=11 // pred_fallthru
          _
        // Predicated region
        $region25: #{mademog_forward.1} parent=11 // pred_check
          %p270 = pneg %p126
        $region26: #{mademog_forward.1} parent=11 // pred_check_branch
          %272 = sbr.rel (%p270) target = $region28
        $region27: #{mademog_forward.1} parent=11 // pred_region
          _
        $region28: #{mademog_forward.1} parent=11 // pred_fallthru
          _
        // Predicated region
        $region29: #{mademog_forward.1} parent=11 // pred_check
          %p273 = pneg %p147
        $region30: #{mademog_forward.1} parent=11 // pred_check_branch
          %275 = sbr.rel (%p273) target = $region32
        $region31: #{mademog_forward.1} parent=11 // pred_region
          _
        $region32: #{mademog_forward.1} parent=11 // pred_fallthru
          _
        // Predicated region
        $region33: #{mademog_forward.1} parent=11 // pred_check
          %p276 = pneg %p168
        $region34: #{mademog_forward.1} parent=11 // pred_check_branch
          %278 = sbr.rel (%p276) target = $region36
        $region35: #{mademog_forward.1} parent=11 // pred_region
          _
        $region36: #{mademog_forward.1} parent=11 // pred_fallthru
          _
      $region12: #{mademog_forward.1} parent=5 // pred_fallthru
        _
      %p279 = scmp.lt.s32.totalorder %s16, 2
      // Predicated region
      $region37: #{mademog_forward.1} parent=5 // pred_check
        %p280 = pneg %p279
      $region38: #{mademog_forward.1} parent=5 // pred_check_branch
        %282 = sbr.rel (%p280) target = $region40
      $region39: #{mademog_forward.1} parent=5 // pred_region
        // Predicated region
        $region41: #{mademog_forward.1} parent=39 // pred_check
          %p283 = pneg %p36
        $region42: #{mademog_forward.1} parent=39 // pred_check_branch
          %285 = sbr.rel (%p283) target = $region44
        $region43: #{mademog_forward.1} parent=39 // pred_region
          %p286 = scmp.lt.s32.totalorder %s16, 1
          %s287 = scalar_select %p286, %s16, 1
          %s288 = smul.addr %s287, 8
          %s289 = scalar_lea.vmem %s0, %s288
        $region44: #{mademog_forward.1} parent=39 // pred_fallthru
          _
      $region40: #{mademog_forward.1} parent=5 // pred_fallthru
        _
      %p290 = scmp.le.s32.totalorder 1, %s16
      %p291 = scmp.lt.s32.totalorder %s16, 3
      %p292 = pnand %p290, %p291
      %p293 = pneg %p292
      // Predicated region
      $region45: #{mademog_forward.1} parent=5 // pred_check
        _
      $region46: #{mademog_forward.1} parent=5 // pred_check_branch
        %295 = sbr.rel (%p292) target = $region48
      $region47: #{mademog_forward.1} parent=5 // pred_region
        %s296 = ssub.s32 %s16, 1
        %p297 = scmp.lt.s32.totalorder %s21, 1
        %s298 = scalar_select %p297, %s21, 1
        %s299 = smul.addr %s298, 8
        %s300 = scalar_lea.vmem %s0, %s299
        %p301 = pneg %p42
        %p302 = pneg %p39
        %p303 = pneg %p63
        %p304 = pneg %p60
        %p305 = pneg %p84
        %p306 = pneg %p81
        %p307 = pneg %p105
        %p308 = pneg %p102
        %p309 = pneg %p126
        %p310 = pneg %p123
        %p311 = pneg %p147
        %p312 = pneg %p144
        %p313 = pneg %p168
        %p314 = pneg %p165
        %p315 = pneg %p194
        %p316 = pneg %p191
        %s317 = sand.u32 %s181, 1
        %s318 = sand.u32 %s181, 1
        %s319 = smul.addr %s318, 32
        %s320 = scalar_lea.vmem [#allocation2], %s319
        %p321 = pneg %p220
        %p322 = pneg %p217
        %s323 = sand.u32 %s207, 1
        %s324 = sand.u32 %s207, 1
        %s325 = smul.addr %s324, 32
        %s326 = scalar_lea.vmem [#allocation3], %s325
        %p327 = pneg %p246
        %p328 = pneg %p243
        %s329 = sand.u32 %s233, 1
        %s330 = sand.u32 %s233, 1
        %s331 = smul.addr %s330, 32
        %s332 = scalar_lea.vmem [#allocation4], %s331
        %p333 = scmp.lt.s32.totalorder %s21, 1
        %s334 = scalar_select %p333, %s21, 1
        %s335 = smul.addr %s334, 8
        %s336 = scalar_lea.vmem %s0, %s335
        %v337 = vld [vmem:[%s336] sm:$0xff]
        %v338 = vld [vmem:[%s1] sm:$0xff]
        %v339 = vld [vmem:[%s1 + $0x8] sm:$0xff]
        %v340 = vld [vmem:[%s1 + $0x10] sm:$0xff]
        %v341 = vld [vmem:[%s1 + $0x18] sm:$0xff]
        %v342 = vld [vmem:[%s2] sm:$0xff]
        %v343 = vld [vmem:[%s2 + $0x8] sm:$0xff]
        %v344 = vld [vmem:[%s2 + $0x10] sm:$0xff]
        %v345 = vld [vmem:[%s2 + $0x18] sm:$0xff]
        %347 = vset.pattern.permute.xlu0 0
        %348 = vperm.xlu0 %347, %v342
        %v349 = vpop.permute.xlu0 %348
        %352 = vset.pattern.permute.xlu0 0
        %353 = vperm.xlu0 %352, %v343
        %v354 = vpop.permute.xlu0 %353
        %357 = vset.pattern.permute.xlu0 0
        %358 = vperm.xlu0 %357, %v344
        %v359 = vpop.permute.xlu0 %358
        %362 = vset.pattern.permute.xlu0 0
        %363 = vperm.xlu0 %362, %v345
        %v364 = vpop.permute.xlu0 %363
        %vm366 = vcmask 64512
        %v368 = vsel %vm366, %v338, 0
        %v371 = vsel %vm366, %v339, 0
        %v374 = vsel %vm366, %v340, 0
        %v377 = vsel %vm366, %v341, 0
        %379 = vmatprep.subr.mxu0 0.0
        %380 = vmatpush1.msra.mxu0 %v337
        %381 = vmatprep.subr.mxu0 0.0
        %382 = vmatpush1.msra.mxu0 0.0
        %383 = vmatprep.subr.mxu0 0.0
        %384 = vmatpush1.msra.mxu0 0.0
        %385 = vmatprep.subr.mxu0 0.0
        %386 = vmatpush1.msra.mxu0 0.0
        %387 = vmatprep.subr.mxu0 0.0
        %388 = vmatpush1.msra.mxu0 0.0
        %389 = vmatprep.subr.mxu0 0.0
        %390 = vmatpush1.msra.mxu0 0.0
        %391 = vmatprep.subr.mxu0 0.0
        %392 = vmatpush1.msra.mxu0 0.0
        %393 = vmatprep.subr.mxu0 0.0
        %394 = vmatpush1.msra.mxu0 0.0
        %395 = vmatprep.subr.mxu0 0.0
        %396 = vmatpush1.msra.mxu0 0.0
        %397 = vmatprep.subr.mxu0 0.0
        %398 = vmatpush1.msra.mxu0 0.0
        %399 = vmatprep.subr.mxu0 0.0
        %400 = vmatpush1.msra.mxu0 0.0
        %401 = vmatprep.subr.mxu0 0.0
        %402 = vmatpush1.msra.mxu0 0.0
        %403 = vmatprep.subr.mxu0 0.0
        %404 = vmatpush1.msra.mxu0 0.0
        %405 = vmatprep.subr.mxu0 0.0
        %406 = vmatpush1.msra.mxu0 0.0
        %407 = vmatprep.subr.mxu0 0.0
        %408 = vmatpush1.msra.mxu0 0.0
        %409 = vmatprep.subr.mxu0 0.0
        %410 = vmatpush1.msra.mxu0 0.0
        %411 = vmatprep.subr.mxu0 0.0
        %412 = vmatpush1.msra.mxu0 0.0
        %413 = vmatprep.subr.mxu0 0.0
        %414 = vmatpush1.msra.mxu0 0.0
        %415 = vmatprep.subr.mxu0 0.0
        %416 = vmatpush1.msra.mxu0 0.0
        %417 = vmatprep.subr.mxu0 0.0
        %418 = vmatpush1.msra.mxu0 0.0
        %419 = vmatprep.subr.mxu0 0.0
        %420 = vmatpush1.msra.mxu0 0.0
        %421 = vmatprep.subr.mxu0 0.0
        %422 = vmatpush1.msra.mxu0 0.0
        %423 = vmatprep.subr.mxu0 0.0
        %424 = vmatpush1.msra.mxu0 0.0
        %425 = vmatprep.subr.mxu0 0.0
        %426 = vmatpush1.msra.mxu0 0.0
        %427 = vmatprep.subr.mxu0 0.0
        %428 = vmatpush1.msra.mxu0 0.0
        %429 = vmatprep.subr.mxu0 0.0
        %430 = vmatpush1.msra.mxu0 0.0
        %431 = vmatprep.subr.mxu0 0.0
        %432 = vmatpush1.msra.mxu0 0.0
        %433 = vmatprep.subr.mxu0 0.0
        %434 = vmatpush1.msra.mxu0 0.0
        %435 = vmatprep.subr.mxu0 0.0
        %436 = vmatpush1.msra.mxu0 0.0
        %437 = vmatprep.subr.mxu0 0.0
        %438 = vmatpush1.msra.mxu0 0.0
        %439 = vmatprep.subr.mxu0 0.0
        %440 = vmatpush1.msra.mxu0 0.0
        %441 = vmatprep.subr.mxu0 0.0
        %442 = vmatpush1.msra.mxu0 0.0
        %443 = vmatprep.mubr.f32.mxu0 0.0
        %444 = vmatmul.mubr.f32.gmra.mrb[0].mxu0 %v368
        %v445 = vpop.f32.mrb[0].mxu0
        %v446 = vadd.f32 %v349, %v445
        %v447 = vpop.f32.mrb[0].mxu0
        %448 = vmatprep.mubr.f32.mxu0 0.0
        %449 = vmatmul.mubr.f32.gmra.mrb[0].mxu0 %v371
        %v450 = vpop.f32.mrb[0].mxu0
        %v451 = vadd.f32 %v354, %v450
        %v452 = vpop.f32.mrb[0].mxu0
        %453 = vmatprep.mubr.f32.mxu0 0.0
        %454 = vmatmul.mubr.f32.gmra.mrb[0].mxu0 %v374
        %v455 = vpop.f32.mrb[0].mxu0
        %v456 = vadd.f32 %v359, %v455
        %v457 = vpop.f32.mrb[0].mxu0
        %458 = vmatprep.mubr.f32.mxu0 0.0
        %459 = vmatmul.mubr.f32.gmra.mrb[0].mxu0 %v377
        %v460 = vpop.f32.mrb[0].mxu0
        %v461 = vadd.f32 %v364, %v460
        %v462 = vpop.f32.mrb[0].mxu0
        %463 = vdwg.mxu0
        %v464 = vmax.f32 %v446, 0.0
        %v465 = vmax.f32 %v451, 0.0
        %v466 = vmax.f32 %v456, 0.0
        %v467 = vmax.f32 %v461, 0.0
        %v468 = vld [vmem:[%s3] sm:$0xff]
        %v469 = vld [vmem:[%s3 + $0x8] sm:$0xff]
        %v470 = vld [vmem:[%s3 + $0x10] sm:$0xff]
        %v471 = vld [vmem:[%s3 + $0x18] sm:$0xff]
        %v472 = vld [vmem:[%s4] sm:$0xff]
        %v473 = vld [vmem:[%s4 + $0x8] sm:$0xff]
        %v474 = vld [vmem:[%s4 + $0x10] sm:$0xff]
        %v475 = vld [vmem:[%s4 + $0x18] sm:$0xff]
        %477 = vset.pattern.permute.xlu0 0
        %478 = vperm.xlu0 %477, %v472
        %v479 = vpop.permute.xlu0 %478
        %482 = vset.pattern.permute.xlu0 0
        %483 = vperm.xlu0 %482, %v473
        %v484 = vpop.permute.xlu0 %483
        %487 = vset.pattern.permute.xlu0 0
        %488 = vperm.xlu0 %487, %v474
        %v489 = vpop.permute.xlu0 %488
        %492 = vset.pattern.permute.xlu0 0
        %493 = vperm.xlu0 %492, %v475
        %v494 = vpop.permute.xlu0 %493
        %vm496 = vcmask 261120
        %v498 = vsel %vm496, %v468, 0
        %v501 = vsel %vm496, %v469, 0
        %v504 = vsel %vm496, %v470, 0
        %v507 = vsel %vm496, %v471, 0
        %509 = vmatprep.subr.mxu0 0.0
        %510 = vmatpush1.msra.mxu0 %v464
        %511 = vmatprep.subr.mxu0 0.0
        %512 = vmatpush1.msra.mxu0 %v465
        %513 = vmatprep.subr.mxu0 0.0
        %514 = vmatpush1.msra.mxu0 %v466
        %515 = vmatprep.subr.mxu0 0.0
        %516 = vmatpush1.msra.mxu0 %v467
        %517 = vmatprep.subr.mxu0 0.0
        %518 = vmatpush1.msra.mxu0 0.0
        %519 = vmatprep.subr.mxu0 0.0
        %520 = vmatpush1.msra.mxu0 0.0
        %521 = vmatprep.subr.mxu0 0.0
        %522 = vmatpush1.msra.mxu0 0.0
        %523 = vmatprep.subr.mxu0 0.0
        %524 = vmatpush1.msra.mxu0 0.0
        %525 = vmatprep.subr.mxu0 0.0
        %526 = vmatpush1.msra.mxu0 0.0
        %527 = vmatprep.subr.mxu0 0.0
        %528 = vmatpush1.msra.mxu0 0.0
        %529 = vmatprep.subr.mxu0 0.0
        %530 = vmatpush1.msra.mxu0 0.0
        %531 = vmatprep.subr.mxu0 0.0
        %532 = vmatpush1.msra.mxu0 0.0
        %533 = vmatprep.subr.mxu0 0.0
        %534 = vmatpush1.msra.mxu0 0.0
        %535 = vmatprep.subr.mxu0 0.0
        %536 = vmatpush1.msra.mxu0 0.0
        %537 = vmatprep.subr.mxu0 0.0
        %538 = vmatpush1.msra.mxu0 0.0
        %539 = vmatprep.subr.mxu0 0.0
        %540 = vmatpush1.msra.mxu0 0.0
        %541 = vmatprep.subr.mxu0 0.0
        %542 = vmatpush1.msra.mxu0 0.0
        %543 = vmatprep.subr.mxu0 0.0
        %544 = vmatpush1.msra.mxu0 0.0
        %545 = vmatprep.subr.mxu0 0.0
        %546 = vmatpush1.msra.mxu0 0.0
        %547 = vmatprep.subr.mxu0 0.0
        %548 = vmatpush1.msra.mxu0 0.0
        %549 = vmatprep.subr.mxu0 0.0
        %550 = vmatpush1.msra.mxu0 0.0
        %551 = vmatprep.subr.mxu0 0.0
        %552 = vmatpush1.msra.mxu0 0.0
        %553 = vmatprep.subr.mxu0 0.0
        %554 = vmatpush1.msra.mxu0 0.0
        %555 = vmatprep.subr.mxu0 0.0
        %556 = vmatpush1.msra.mxu0 0.0
        %557 = vmatprep.subr.mxu0 0.0
        %558 = vmatpush1.msra.mxu0 0.0
        %559 = vmatprep.subr.mxu0 0.0
        %560 = vmatpush1.msra.mxu0 0.0
        %561 = vmatprep.subr.mxu0 0.0
        %562 = vmatpush1.msra.mxu0 0.0
        %563 = vmatprep.subr.mxu0 0.0
        %564 = vmatpush1.msra.mxu0 0.0
        %565 = vmatprep.subr.mxu0 0.0
        %566 = vmatpush1.msra.mxu0 0.0
        %567 = vmatprep.subr.mxu0 0.0
        %568 = vmatpush1.msra.mxu0 0.0
        %569 = vmatprep.subr.mxu0 0.0
        %570 = vmatpush1.msra.mxu0 0.0
        %571 = vmatprep.subr.mxu0 0.0
        %572 = vmatpush1.msra.mxu0 0.0
        %573 = vmatprep.mubr.f32.mxu0 0.0
        %574 = vmatmul.mubr.f32.gmra.mrb[0].mxu0 %v498
        %v575 = vpop.f32.mrb[0].mxu0
        %v576 = vadd.f32 %v479, %v575
        %v577 = vpop.f32.mrb[0].mxu0
        %578 = vmatprep.mubr.f32.mxu0 0.0
        %579 = vmatmul.mubr.f32.gmra.mrb[0].mxu0 %v501
        %v580 = vpop.f32.mrb[0].mxu0
        %v581 = vadd.f32 %v484, %v580
        %v582 = vpop.f32.mrb[0].mxu0
        %583 = vmatprep.mubr.f32.mxu0 0.0
        %584 = vmatmul.mubr.f32.gmra.mrb[0].mxu0 %v504
        %v585 = vpop.f32.mrb[0].mxu0
        %v586 = vadd.f32 %v489, %v585
        %v587 = vpop.f32.mrb[0].mxu0
        %588 = vmatprep.mubr.f32.mxu0 0.0
        %589 = vmatmul.mubr.f32.gmra.mrb[0].mxu0 %v507
        %v590 = vpop.f32.mrb[0].mxu0
        %v591 = vadd.f32 %v494, %v590
        %v592 = vpop.f32.mrb[0].mxu0
        %593 = vdwg.mxu0
        %v594 = vmax.f32 %v576, 0.0
        %v595 = vmax.f32 %v581, 0.0
        %v596 = vmax.f32 %v586, 0.0
        %v597 = vmax.f32 %v591, 0.0
        %v598 = vld [vmem:[%s5] sm:$0xff]
        %v599 = vld [vmem:[%s5 + $0x8] sm:$0xff]
        %v600 = vld [vmem:[%s5 + $0x10] sm:$0xff]
        %v601 = vld [vmem:[%s5 + $0x18] sm:$0xff]
        %v602 = vld [vmem:[%s5 + $0x20] sm:$0xff]
        %v603 = vld [vmem:[%s5 + $0x28] sm:$0xff]
        %v604 = vld [vmem:[%s5 + $0x30] sm:$0xff]
        %v605 = vld [vmem:[%s5 + $0x38] sm:$0xff]
        %v606 = vld [vmem:[%s5 + $0x40] sm:$0xff]
        %v607 = vld [vmem:[%s5 + $0x48] sm:$0xff]
        %v608 = vld [vmem:[%s5 + $0x50] sm:$0xff]
        %v609 = vld [vmem:[%s5 + $0x58] sm:$0xff]
        %v610 = vld [vmem:[%s6] sm:$0xff]
        %v611 = vld [vmem:[%s6 + $0x8] sm:$0xff]
        %v612 = vld [vmem:[%s6 + $0x10] sm:$0xff]
        %v613 = vld [vmem:[%s6 + $0x18] sm:$0xff]
        %v614 = vld [vmem:[%s6 + $0x20] sm:$0xff]
        %v615 = vld [vmem:[%s6 + $0x28] sm:$0xff]
        %v616 = vld [vmem:[%s6 + $0x30] sm:$0xff]
        %v617 = vld [vmem:[%s6 + $0x38] sm:$0xff]
        %v618 = vld [vmem:[%s6 + $0x40] sm:$0xff]
        %v619 = vld [vmem:[%s6 + $0x48] sm:$0xff]
        %v620 = vld [vmem:[%s6 + $0x50] sm:$0xff]
        %v621 = vld [vmem:[%s6 + $0x58] sm:$0xff]
        %623 = vset.pattern.permute.xlu0 0
        %624 = vperm.xlu0 %623, %v610
        %v625 = vpop.permute.xlu0 %624
        %628 = vset.pattern.permute.xlu0 0
        %629 = vperm.xlu0 %628, %v611
        %v630 = vpop.permute.xlu0 %629
        %633 = vset.pattern.permute.xlu0 0
        %634 = vperm.xlu0 %633, %v612
        %v635 = vpop.permute.xlu0 %634
        %638 = vset.pattern.permute.xlu0 0
        %639 = vperm.xlu0 %638, %v613
        %v640 = vpop.permute.xlu0 %639
        %643 = vset.pattern.permute.xlu0 0
        %644 = vperm.xlu0 %643, %v614
        %v645 = vpop.permute.xlu0 %644
        %648 = vset.pattern.permute.xlu0 0
        %649 = vperm.xlu0 %648, %v615
        %v650 = vpop.permute.xlu0 %649
        %653 = vset.pattern.permute.xlu0 0
        %654 = vperm.xlu0 %653, %v616
        %v655 = vpop.permute.xlu0 %654
        %658 = vset.pattern.permute.xlu0 0
        %659 = vperm.xlu0 %658, %v617
        %v660 = vpop.permute.xlu0 %659
        %663 = vset.pattern.permute.xlu0 0
        %664 = vperm.xlu0 %663, %v618
        %v665 = vpop.permute.xlu0 %664
        %668 = vset.pattern.permute.xlu0 0
        %669 = vperm.xlu0 %668, %v619
        %v670 = vpop.permute.xlu0 %669
        %673 = vset.pattern.permute.xlu0 0
        %674 = vperm.xlu0 %673, %v620
        %v675 = vpop.permute.xlu0 %674
        %678 = vset.pattern.permute.xlu0 0
        %679 = vperm.xlu0 %678, %v621
        %v680 = vpop.permute.xlu0 %679
        %v683 = vsel %vm496, %v598, 0
        %v686 = vsel %vm496, %v599, 0
        %v689 = vsel %vm496, %v600, 0
        %v692 = vsel %vm496, %v601, 0
        %v695 = vsel %vm496, %v602, 0
        %v698 = vsel %vm496, %v603, 0
        %v701 = vsel %vm496, %v604, 0
        %v704 = vsel %vm496, %v605, 0
        %v707 = vsel %vm496, %v606, 0
        %v710 = vsel %vm496, %v607, 0
        %v713 = vsel %vm496, %v608, 0
        %v716 = vsel %vm496, %v609, 0
        %718 = vmatprep.subr.mxu0 0.0
        %719 = vmatpush1.msra.mxu0 %v594
        %720 = vmatprep.subr.mxu0 0.0
        %721 = vmatpush1.msra.mxu0 %v595
        %722 = vmatprep.subr.mxu0 0.0
        %723 = vmatpush1.msra.mxu0 %v596
        %724 = vmatprep.subr.mxu0 0.0
        %725 = vmatpush1.msra.mxu0 %v597
        %726 = vmatprep.subr.mxu0 0.0
        %727 = vmatpush1.msra.mxu0 0.0
        %728 = vmatprep.subr.mxu0 0.0
        %729 = vmatpush1.msra.mxu0 0.0
        %730 = vmatprep.subr.mxu0 0.0
        %731 = vmatpush1.msra.mxu0 0.0
        %732 = vmatprep.subr.mxu0 0.0
        %733 = vmatpush1.msra.mxu0 0.0
        %734 = vmatprep.subr.mxu0 0.0
        %735 = vmatpush1.msra.mxu0 0.0
        %736 = vmatprep.subr.mxu0 0.0
        %737 = vmatpush1.msra.mxu0 0.0
        %738 = vmatprep.subr.mxu0 0.0
        %739 = vmatpush1.msra.mxu0 0.0
        %740 = vmatprep.subr.mxu0 0.0
        %741 = vmatpush1.msra.mxu0 0.0
        %742 = vmatprep.subr.mxu0 0.0
        %743 = vmatpush1.msra.mxu0 0.0
        %744 = vmatprep.subr.mxu0 0.0
        %745 = vmatpush1.msra.mxu0 0.0
        %746 = vmatprep.subr.mxu0 0.0
        %747 = vmatpush1.msra.mxu0 0.0
        %748 = vmatprep.subr.mxu0 0.0
        %749 = vmatpush1.msra.mxu0 0.0
        %750 = vmatprep.subr.mxu0 0.0
        %751 = vmatpush1.msra.mxu0 0.0
        %752 = vmatprep.subr.mxu0 0.0
        %753 = vmatpush1.msra.mxu0 0.0
        %754 = vmatprep.subr.mxu0 0.0
        %755 = vmatpush1.msra.mxu0 0.0
        %756 = vmatprep.subr.mxu0 0.0
        %757 = vmatpush1.msra.mxu0 0.0
        %758 = vmatprep.subr.mxu0 0.0
        %759 = vmatpush1.msra.mxu0 0.0
        %760 = vmatprep.subr.mxu0 0.0
        %761 = vmatpush1.msra.mxu0 0.0
        %762 = vmatprep.subr.mxu0 0.0
        %763 = vmatpush1.msra.mxu0 0.0
        %764 = vmatprep.subr.mxu0 0.0
        %765 = vmatpush1.msra.mxu0 0.0
        %766 = vmatprep.subr.mxu0 0.0
        %767 = vmatpush1.msra.mxu0 0.0
        %768 = vmatprep.subr.mxu0 0.0
        %769 = vmatpush1.msra.mxu0 0.0
        %770 = vmatprep.subr.mxu0 0.0
        %771 = vmatpush1.msra.mxu0 0.0
        %772 = vmatprep.subr.mxu0 0.0
        %773 = vmatpush1.msra.mxu0 0.0
        %774 = vmatprep.subr.mxu0 0.0
        %775 = vmatpush1.msra.mxu0 0.0
        %776 = vmatprep.subr.mxu0 0.0
        %777 = vmatpush1.msra.mxu0 0.0
        %778 = vmatprep.subr.mxu0 0.0
        %779 = vmatpush1.msra.mxu0 0.0
        %780 = vmatprep.subr.mxu0 0.0
        %781 = vmatpush1.msra.mxu0 0.0
        %782 = vmatprep.mubr.f32.mxu0 0.0
        %783 = vmatmul.mubr.f32.gmra.mrb[0].mxu0 %v683
        %v784 = vpop.f32.mrb[0].mxu0
        %v785 = vadd.f32 %v625, %v784
        %v786 = vpop.f32.mrb[0].mxu0
        %787 = vmatprep.mubr.f32.mxu0 0.0
        %788 = vmatmul.mubr.f32.gmra.mrb[0].mxu0 %v686
        %v789 = vpop.f32.mrb[0].mxu0
        %v790 = vadd.f32 %v630, %v789
        %v791 = vpop.f32.mrb[0].mxu0
        %792 = vmatprep.mubr.f32.mxu0 0.0
        %793 = vmatmul.mubr.f32.gmra.mrb[0].mxu0 %v689
        %v794 = vpop.f32.mrb[0].mxu0
        %v795 = vadd.f32 %v635, %v794
        %v796 = vpop.f32.mrb[0].mxu0
        %797 = vmatprep.mubr.f32.mxu0 0.0
        %798 = vmatmul.mubr.f32.gmra.mrb[0].mxu0 %v692
        %v799 = vpop.f32.mrb[0].mxu0
        %v800 = vadd.f32 %v640, %v799
        %v801 = vpop.f32.mrb[0].mxu0
        %802 = vmatprep.mubr.f32.mxu0 0.0
        %803 = vmatmul.mubr.f32.gmra.mrb[0].mxu0 %v695
        %v804 = vpop.f32.mrb[0].mxu0
        %v805 = vadd.f32 %v645, %v804
        %v806 = vpop.f32.mrb[0].mxu0
        %807 = vmatprep.mubr.f32.mxu0 0.0
        %808 = vmatmul.mubr.f32.gmra.mrb[0].mxu0 %v698
        %v809 = vpop.f32.mrb[0].mxu0
        %v810 = vadd.f32 %v650, %v809
        %v811 = vpop.f32.mrb[0].mxu0
        %812 = vmatprep.mubr.f32.mxu0 0.0
        %813 = vmatmul.mubr.f32.gmra.mrb[0].mxu0 %v701
        %v814 = vpop.f32.mrb[0].mxu0
        %v815 = vadd.f32 %v655, %v814
        %v816 = vpop.f32.mrb[0].mxu0
        %817 = vmatprep.mubr.f32.mxu0 0.0
        %818 = vmatmul.mubr.f32.gmra.mrb[0].mxu0 %v704
        %v819 = vpop.f32.mrb[0].mxu0
        %v820 = vadd.f32 %v660, %v819
        %v821 = vpop.f32.mrb[0].mxu0
        %822 = vmatprep.mubr.f32.mxu0 0.0
        %823 = vmatmul.mubr.f32.gmra.mrb[0].mxu0 %v707
        %v824 = vpop.f32.mrb[0].mxu0
        %v825 = vadd.f32 %v665, %v824
        %v826 = vpop.f32.mrb[0].mxu0
        %827 = vmatprep.mubr.f32.mxu0 0.0
        %828 = vmatmul.mubr.f32.gmra.mrb[0].mxu0 %v710
        %v829 = vpop.f32.mrb[0].mxu0
        %v830 = vadd.f32 %v670, %v829
        %v831 = vpop.f32.mrb[0].mxu0
        %832 = vmatprep.mubr.f32.mxu0 0.0
        %833 = vmatmul.mubr.f32.gmra.mrb[0].mxu0 %v713
        %v834 = vpop.f32.mrb[0].mxu0
        %v835 = vadd.f32 %v675, %v834
        %v836 = vpop.f32.mrb[0].mxu0
        %837 = vmatprep.mubr.f32.mxu0 0.0
        %838 = vmatmul.mubr.f32.gmra.mrb[0].mxu0 %v716
        %v839 = vpop.f32.mrb[0].mxu0
        %v840 = vadd.f32 %v680, %v839
        %v841 = vpop.f32.mrb[0].mxu0
        %842 = vdwg.mxu0
        %v843 = vsub.f32 %v337, %v785
        %v844 = vsub.f32 %v337, %v790
        %v845 = vsub.f32 %v337, %v795
        %v846 = vsub.f32 %v337, %v800
        %v847 = vsub.f32 0.0, %v805
        %v848 = vsub.f32 0.0, %v810
        %v849 = vsub.f32 0.0, %v815
        %v850 = vsub.f32 0.0, %v820
        %v851 = vmul.f32 %v847, 1.442695
        %v852 = vpow.pop %v851
        %v853 = vmul.f32 %v848, 1.442695
        %v854 = vpow.pop %v853
        %v855 = vmul.f32 %v849, 1.442695
        %v856 = vpow.pop %v855
        %v857 = vmul.f32 %v850, 1.442695
        %v858 = vpow.pop %v857
        %v859 = vmul.f32 %v843, %v852
        %v860 = vmul.f32 %v844, %v854
        %v861 = vmul.f32 %v845, %v856
        %v862 = vmul.f32 %v846, %v858
        %863 = vst [vmem:[%s320] sm:$0xff] %v859
        %864 = vst [vmem:[%s320 + $0x8] sm:$0xff] %v860
        %865 = vst [vmem:[%s320 + $0x10] sm:$0xff] %v861
        %866 = vst [vmem:[%s320 + $0x18] sm:$0xff] %v862
        %867 = vst [vmem:[%s326] sm:$0xff] %v847
        %868 = vst [vmem:[%s326 + $0x8] sm:$0xff] %v848
        %869 = vst [vmem:[%s326 + $0x10] sm:$0xff] %v849
        %870 = vst [vmem:[%s326 + $0x18] sm:$0xff] %v850
        %v871 = vmax.f32 %v825, %v830
        %v872 = vmax.f32 %v871, %v835
        %v873 = vmax.f32 %v872, %v840
        %v874 = vsub.f32 %v825, %v873
        %v875 = vmul.f32 %v874, 1.442695
        %v876 = vpow.pop %v875
        %v877 = vsub.f32 %v830, %v873
        %v878 = vmul.f32 %v877, 1.442695
        %v879 = vpow.pop %v878
        %v880 = vadd.f32 %v876, %v879
        %v881 = vsub.f32 %v835, %v873
        %v882 = vmul.f32 %v881, 1.442695
        %v883 = vpow.pop %v882
        %v884 = vadd.f32 %v880, %v883
        %v885 = vsub.f32 %v840, %v873
        %v886 = vmul.f32 %v885, 1.442695
        %v887 = vpow.pop %v886
        %v888 = vadd.f32 %v884, %v887
        %v889 = vlog2.pop %v888
        %v890 = vmul.f32 %v889, 0.6931472
        %v891 = vadd.f32 %v873, %v890
        %v892 = vsub.f32 %v825, %v891
        %v893 = vsub.f32 %v830, %v891
        %v894 = vsub.f32 %v835, %v891
        %v895 = vsub.f32 %v840, %v891
        %896 = vst [vmem:[%s332] sm:$0xff] %v892
        %897 = vst [vmem:[%s332 + $0x8] sm:$0xff] %v893
        %898 = vst [vmem:[%s332 + $0x10] sm:$0xff] %v894
        %899 = vst [vmem:[%s332 + $0x18] sm:$0xff] %v895
        %s900 = sand.u32 %s181, 1
        %s901 = sand.u32 %s181, 1
        %s902 = smul.addr %s901, 32
        %s903 = scalar_lea.vmem [#allocation2], %s902
        %s904 = sand.u32 %s207, 1
        %s905 = sand.u32 %s207, 1
        %s906 = smul.addr %s905, 32
        %s907 = scalar_lea.vmem [#allocation3], %s906
        %s908 = sand.u32 %s233, 1
        %s909 = sand.u32 %s233, 1
        %s910 = smul.addr %s909, 32
        %s911 = scalar_lea.vmem [#allocation4], %s910
        // Predicated region
        $region49: #{mademog_forward.1} parent=47 // pred_check
          %p912 = pneg %p191
        $region50: #{mademog_forward.1} parent=47 // pred_check_branch
          %914 = sbr.rel (%p912) target = $region52
        $region51: #{mademog_forward.1} parent=47 // pred_region
          %s915 = smul.addr %s21, 8
          %s916 = scalar_lea.vmem %s7, %s915
          // Predicated region
          $region53: #{mademog_forward.1} parent=51 // pred_check
            _
          $region54: #{mademog_forward.1} parent=51 // pred_check_branch
            %918 = sbr.rel (0) target = $region56
          $region55: #{mademog_forward.1} parent=51 // pred_region
            // Predicated region
            $region57: #{mademog_forward.1} parent=55 // pred_check
              _
            $region58: #{mademog_forward.1} parent=55 // pred_check_branch
              %920 = sbr.rel (0) target = $region60
            $region59: #{mademog_forward.1} parent=55 // pred_region
              // Predicated region
              $region72: #{mademog_forward.1} parent=59 // pred_check
                _
              $region73: #{mademog_forward.1} parent=59 // pred_check_branch
                %941 = sbr.rel (0) target = $region75
              $region74: #{mademog_forward.1} parent=59 // pred_region
                loop: start=0, step=1, limit=1
                $region76: #{mademog_forward.1} parent=74 // loop_pre_header
                  _
                $region77: #{mademog_forward.1} parent=74 // loop_header
                  %s943 = sphi 0, %s947
                  %p944 = scmp.ge.s32.totalorder %s943, 1
                  %s948 = sphi %s903, %s903
                  %s949 = sphi %s916, %s916
                $region78: #{mademog_forward.1} parent=74 // loop_header_branch
                  %946 = sbr.rel (%p944) target = $region82
                $region79: #{mademog_forward.1} parent=74 // loop_body
                  %v950 = vld [vmem:[%s948] sm:$0xff]
                  %951 = vst [vmem:[%s949] sm:$0xff] %v950
                  %v952 = vld [vmem:[%s948 + $0x8] sm:$0xff]
                  %953 = vst [vmem:[%s949 + $0x10] sm:$0xff] %v952
                  %v954 = vld [vmem:[%s948 + $0x10] sm:$0xff]
                  %955 = vst [vmem:[%s949 + $0x20] sm:$0xff] %v954
                  %v956 = vld [vmem:[%s948 + $0x18] sm:$0xff]
                  %957 = vst [vmem:[%s949 + $0x30] sm:$0xff] %v956
                $region80: #{mademog_forward.1} parent=74 // loop_footer
                  %s947 = sadd.s32 1, %s943
                $region81: #{mademog_forward.1} parent=74 // loop_footer_branch
                  %942 = sbr.rel target = $region77
                $region82: #{mademog_forward.1} parent=74 // loop_exit
                  _
              $region75: #{mademog_forward.1} parent=59 // pred_fallthru
                _
              // Predicated region
              $region83: #{mademog_forward.1} parent=59 // pred_check
                _
              $region84: #{mademog_forward.1} parent=59 // pred_check_branch
                %959 = sbr.rel target = $region86
              $region85: #{mademog_forward.1} parent=59 // pred_region
                _
              $region86: #{mademog_forward.1} parent=59 // pred_fallthru
                _
            $region60: #{mademog_forward.1} parent=55 // pred_fallthru
              _
            // Predicated region
            $region61: #{mademog_forward.1} parent=55 // pred_check
              _
            $region62: #{mademog_forward.1} parent=55 // pred_check_branch
              %922 = sbr.rel target = $region64
            $region63: #{mademog_forward.1} parent=55 // pred_region
              loop: start=0, step=1, limit=1
              $region65: #{mademog_forward.1} parent=63 // loop_pre_header
                _
              $region66: #{mademog_forward.1} parent=63 // loop_header
                %s925 = sphi 0, %s929
                %p926 = scmp.ge.s32.totalorder %s925, 1
                %s930 = sphi %s903, %s903
                %s931 = sphi %s916, %s916
              $region67: #{mademog_forward.1} parent=63 // loop_header_branch
                %928 = sbr.rel (%p926) target = $region71
              $region68: #{mademog_forward.1} parent=63 // loop_body
                %v932 = vld [vmem:[%s930] sm:$0xff]
                %933 = vst [vmem:[%s931] sm:$0xff] %v932
                %v934 = vld [vmem:[%s930 + $0x8] sm:$0xff]
                %935 = vst [vmem:[%s931 + $0x10] sm:$0xff] %v934
                %v936 = vld [vmem:[%s930 + $0x10] sm:$0xff]
                %937 = vst [vmem:[%s931 + $0x20] sm:$0xff] %v936
                %v938 = vld [vmem:[%s930 + $0x18] sm:$0xff]
                %939 = vst [vmem:[%s931 + $0x30] sm:$0xff] %v938
              $region69: #{mademog_forward.1} parent=63 // loop_footer
                %s929 = sadd.s32 1, %s925
              $region70: #{mademog_forward.1} parent=63 // loop_footer_branch
                %924 = sbr.rel target = $region66
              $region71: #{mademog_forward.1} parent=63 // loop_exit
                _
            $region64: #{mademog_forward.1} parent=55 // pred_fallthru
              _
          $region56: #{mademog_forward.1} parent=51 // pred_fallthru
            _
          %960 = vnop
        $region52: #{mademog_forward.1} parent=47 // pred_fallthru
          _
        // Predicated region
        $region87: #{mademog_forward.1} parent=47 // pred_check
          %p961 = pneg %p217
        $region88: #{mademog_forward.1} parent=47 // pred_check_branch
          %963 = sbr.rel (%p961) target = $region90
        $region89: #{mademog_forward.1} parent=47 // pred_region
          %s964 = smul.addr %s21, 8
          %s965 = scalar_lea.vmem %s8, %s964
          // Predicated region
          $region91: #{mademog_forward.1} parent=89 // pred_check
            _
          $region92: #{mademog_forward.1} parent=89 // pred_check_branch
            %967 = sbr.rel (0) target = $region94
          $region93: #{mademog_forward.1} parent=89 // pred_region
            // Predicated region
            $region95: #{mademog_forward.1} parent=93 // pred_check
              _
            $region96: #{mademog_forward.1} parent=93 // pred_check_branch
              %969 = sbr.rel (0) target = $region98
            $region97: #{mademog_forward.1} parent=93 // pred_region
              // Predicated region
              $region110: #{mademog_forward.1} parent=97 // pred_check
                _
              $region111: #{mademog_forward.1} parent=97 // pred_check_branch
                %990 = sbr.rel (0) target = $region113
              $region112: #{mademog_forward.1} parent=97 // pred_region
                loop: start=0, step=1, limit=1
                $region114: #{mademog_forward.1} parent=112 // loop_pre_header
                  _
                $region115: #{mademog_forward.1} parent=112 // loop_header
                  %s992 = sphi 0, %s996
                  %p993 = scmp.ge.s32.totalorder %s992, 1
                  %s997 = sphi %s907, %s907
                  %s998 = sphi %s965, %s965
                $region116: #{mademog_forward.1} parent=112 // loop_header_branch
                  %995 = sbr.rel (%p993) target = $region120
                $region117: #{mademog_forward.1} parent=112 // loop_body
                  %v999 = vld [vmem:[%s997] sm:$0xff]
                  %1000 = vst [vmem:[%s998] sm:$0xff] %v999
                  %v1001 = vld [vmem:[%s997 + $0x8] sm:$0xff]
                  %1002 = vst [vmem:[%s998 + $0x10] sm:$0xff] %v1001
                  %v1003 = vld [vmem:[%s997 + $0x10] sm:$0xff]
                  %1004 = vst [vmem:[%s998 + $0x20] sm:$0xff] %v1003
                  %v1005 = vld [vmem:[%s997 + $0x18] sm:$0xff]
                  %1006 = vst [vmem:[%s998 + $0x30] sm:$0xff] %v1005
                $region118: #{mademog_forward.1} parent=112 // loop_footer
                  %s996 = sadd.s32 1, %s992
                $region119: #{mademog_forward.1} parent=112 // loop_footer_branch
                  %991 = sbr.rel target = $region115
                $region120: #{mademog_forward.1} parent=112 // loop_exit
                  _
              $region113: #{mademog_forward.1} parent=97 // pred_fallthru
                _
              // Predicated region
              $region121: #{mademog_forward.1} parent=97 // pred_check
                _
              $region122: #{mademog_forward.1} parent=97 // pred_check_branch
                %1008 = sbr.rel target = $region124
              $region123: #{mademog_forward.1} parent=97 // pred_region
                _
              $region124: #{mademog_forward.1} parent=97 // pred_fallthru
                _
            $region98: #{mademog_forward.1} parent=93 // pred_fallthru
              _
            // Predicated region
            $region99: #{mademog_forward.1} parent=93 // pred_check
              _
            $region100: #{mademog_forward.1} parent=93 // pred_check_branch
              %971 = sbr.rel target = $region102
            $region101: #{mademog_forward.1} parent=93 // pred_region
              loop: start=0, step=1, limit=1
              $region103: #{mademog_forward.1} parent=101 // loop_pre_header
                _
              $region104: #{mademog_forward.1} parent=101 // loop_header
                %s974 = sphi 0, %s978
                %p975 = scmp.ge.s32.totalorder %s974, 1
                %s979 = sphi %s907, %s907
                %s980 = sphi %s965, %s965
              $region105: #{mademog_forward.1} parent=101 // loop_header_branch
                %977 = sbr.rel (%p975) target = $region109
              $region106: #{mademog_forward.1} parent=101 // loop_body
                %v981 = vld [vmem:[%s979] sm:$0xff]
                %982 = vst [vmem:[%s980] sm:$0xff] %v981
                %v983 = vld [vmem:[%s979 + $0x8] sm:$0xff]
                %984 = vst [vmem:[%s980 + $0x10] sm:$0xff] %v983
                %v985 = vld [vmem:[%s979 + $0x10] sm:$0xff]
                %986 = vst [vmem:[%s980 + $0x20] sm:$0xff] %v985
                %v987 = vld [vmem:[%s979 + $0x18] sm:$0xff]
                %988 = vst [vmem:[%s980 + $0x30] sm:$0xff] %v987
              $region107: #{mademog_forward.1} parent=101 // loop_footer
                %s978 = sadd.s32 1, %s974
              $region108: #{mademog_forward.1} parent=101 // loop_footer_branch
                %973 = sbr.rel target = $region104
              $region109: #{mademog_forward.1} parent=101 // loop_exit
                _
            $region102: #{mademog_forward.1} parent=93 // pred_fallthru
              _
          $region94: #{mademog_forward.1} parent=89 // pred_fallthru
            _
          %1009 = vnop
        $region90: #{mademog_forward.1} parent=47 // pred_fallthru
          _
        // Predicated region
        $region125: #{mademog_forward.1} parent=47 // pred_check
          %p1010 = pneg %p243
        $region126: #{mademog_forward.1} parent=47 // pred_check_branch
          %1012 = sbr.rel (%p1010) target = $region128
        $region127: #{mademog_forward.1} parent=47 // pred_region
          %s1013 = smul.addr %s21, 8
          %s1014 = scalar_lea.vmem %s9, %s1013
          // Predicated region
          $region129: #{mademog_forward.1} parent=127 // pred_check
            _
          $region130: #{mademog_forward.1} parent=127 // pred_check_branch
            %1016 = sbr.rel (0) target = $region132
          $region131: #{mademog_forward.1} parent=127 // pred_region
            // Predicated region
            $region133: #{mademog_forward.1} parent=131 // pred_check
              _
            $region134: #{mademog_forward.1} parent=131 // pred_check_branch
              %1018 = sbr.rel (0) target = $region136
            $region135: #{mademog_forward.1} parent=131 // pred_region
              // Predicated region
              $region148: #{mademog_forward.1} parent=135 // pred_check
                _
              $region149: #{mademog_forward.1} parent=135 // pred_check_branch
                %1039 = sbr.rel (0) target = $region151
              $region150: #{mademog_forward.1} parent=135 // pred_region
                loop: start=0, step=1, limit=1
                $region152: #{mademog_forward.1} parent=150 // loop_pre_header
                  _
                $region153: #{mademog_forward.1} parent=150 // loop_header
                  %s1041 = sphi 0, %s1045
                  %p1042 = scmp.ge.s32.totalorder %s1041, 1
                  %s1046 = sphi %s911, %s911
                  %s1047 = sphi %s1014, %s1014
                $region154: #{mademog_forward.1} parent=150 // loop_header_branch
                  %1044 = sbr.rel (%p1042) target = $region158
                $region155: #{mademog_forward.1} parent=150 // loop_body
                  %v1048 = vld [vmem:[%s1046] sm:$0xff]
                  %1049 = vst [vmem:[%s1047] sm:$0xff] %v1048
                  %v1050 = vld [vmem:[%s1046 + $0x8] sm:$0xff]
                  %1051 = vst [vmem:[%s1047 + $0x10] sm:$0xff] %v1050
                  %v1052 = vld [vmem:[%s1046 + $0x10] sm:$0xff]
                  %1053 = vst [vmem:[%s1047 + $0x20] sm:$0xff] %v1052
                  %v1054 = vld [vmem:[%s1046 + $0x18] sm:$0xff]
                  %1055 = vst [vmem:[%s1047 + $0x30] sm:$0xff] %v1054
                $region156: #{mademog_forward.1} parent=150 // loop_footer
                  %s1045 = sadd.s32 1, %s1041
                $region157: #{mademog_forward.1} parent=150 // loop_footer_branch
                  %1040 = sbr.rel target = $region153
                $region158: #{mademog_forward.1} parent=150 // loop_exit
                  _
              $region151: #{mademog_forward.1} parent=135 // pred_fallthru
                _
              // Predicated region
              $region159: #{mademog_forward.1} parent=135 // pred_check
                _
              $region160: #{mademog_forward.1} parent=135 // pred_check_branch
                %1057 = sbr.rel target = $region162
              $region161: #{mademog_forward.1} parent=135 // pred_region
                _
              $region162: #{mademog_forward.1} parent=135 // pred_fallthru
                _
            $region136: #{mademog_forward.1} parent=131 // pred_fallthru
              _
            // Predicated region
            $region137: #{mademog_forward.1} parent=131 // pred_check
              _
            $region138: #{mademog_forward.1} parent=131 // pred_check_branch
              %1020 = sbr.rel target = $region140
            $region139: #{mademog_forward.1} parent=131 // pred_region
              loop: start=0, step=1, limit=1
              $region141: #{mademog_forward.1} parent=139 // loop_pre_header
                _
              $region142: #{mademog_forward.1} parent=139 // loop_header
                %s1023 = sphi 0, %s1027
                %p1024 = scmp.ge.s32.totalorder %s1023, 1
                %s1028 = sphi %s911, %s911
                %s1029 = sphi %s1014, %s1014
              $region143: #{mademog_forward.1} parent=139 // loop_header_branch
                %1026 = sbr.rel (%p1024) target = $region147
              $region144: #{mademog_forward.1} parent=139 // loop_body
                %v1030 = vld [vmem:[%s1028] sm:$0xff]
                %1031 = vst [vmem:[%s1029] sm:$0xff] %v1030
                %v1032 = vld [vmem:[%s1028 + $0x8] sm:$0xff]
                %1033 = vst [vmem:[%s1029 + $0x10] sm:$0xff] %v1032
                %v1034 = vld [vmem:[%s1028 + $0x10] sm:$0xff]
                %1035 = vst [vmem:[%s1029 + $0x20] sm:$0xff] %v1034
                %v1036 = vld [vmem:[%s1028 + $0x18] sm:$0xff]
                %1037 = vst [vmem:[%s1029 + $0x30] sm:$0xff] %v1036
              $region145: #{mademog_forward.1} parent=139 // loop_footer
                %s1027 = sadd.s32 1, %s1023
              $region146: #{mademog_forward.1} parent=139 // loop_footer_branch
                %1022 = sbr.rel target = $region142
              $region147: #{mademog_forward.1} parent=139 // loop_exit
                _
            $region140: #{mademog_forward.1} parent=131 // pred_fallthru
              _
          $region132: #{mademog_forward.1} parent=127 // pred_fallthru
            _
          %1058 = vnop
        $region128: #{mademog_forward.1} parent=47 // pred_fallthru
          _
      $region48: #{mademog_forward.1} parent=5 // pred_fallthru
        _
      %p1059 = scmp.le.s32.totalorder 2, %s16
      // Predicated region
      $region163: #{mademog_forward.1} parent=5 // pred_check
        %p1060 = pneg %p1059
      $region164: #{mademog_forward.1} parent=5 // pred_check_branch
        %1062 = sbr.rel (%p1060) target = $region166
      $region165: #{mademog_forward.1} parent=5 // pred_region
        %s1063 = ssub.s32 %s16, 2
        // Predicated region
        $region167: #{mademog_forward.1} parent=165 // pred_check
          %p1064 = pneg %p197
        $region168: #{mademog_forward.1} parent=165 // pred_check_branch
          %1066 = sbr.rel (%p1064) target = $region170
        $region169: #{mademog_forward.1} parent=165 // pred_region
          %s1067 = sand.u32 %s182, 1
          %s1068 = sand.u32 %s182, 1
          %s1069 = smul.addr %s1068, 32
          %s1070 = scalar_lea.vmem [#allocation2], %s1069
        $region170: #{mademog_forward.1} parent=165 // pred_fallthru
          _
        // Predicated region
        $region171: #{mademog_forward.1} parent=165 // pred_check
          %p1071 = pneg %p223
        $region172: #{mademog_forward.1} parent=165 // pred_check_branch
          %1073 = sbr.rel (%p1071) target = $region174
        $region173: #{mademog_forward.1} parent=165 // pred_region
          %s1074 = sand.u32 %s208, 1
          %s1075 = sand.u32 %s208, 1
          %s1076 = smul.addr %s1075, 32
          %s1077 = scalar_lea.vmem [#allocation3], %s1076
        $region174: #{mademog_forward.1} parent=165 // pred_fallthru
          _
        // Predicated region
        $region175: #{mademog_forward.1} parent=165 // pred_check
          %p1078 = pneg %p249
        $region176: #{mademog_forward.1} parent=165 // pred_check_branch
          %1080 = sbr.rel (%p1078) target = $region178
        $region177: #{mademog_forward.1} parent=165 // pred_region
          %s1081 = sand.u32 %s234, 1
          %s1082 = sand.u32 %s234, 1
          %s1083 = smul.addr %s1082, 32
          %s1084 = scalar_lea.vmem [#allocation4], %s1083
        $region178: #{mademog_forward.1} parent=165 // pred_fallthru
          _
      $region166: #{mademog_forward.1} parent=5 // pred_fallthru
        _
    $region6: #{mademog_forward.1} parent=1 // loop_footer
      %s20 = sadd.s32 1, %s16
    $region7: #{mademog_forward.1} parent=1 // loop_footer_branch
      %15 = sbr.rel target = $region3
    $region8: #{mademog_forward.1} parent=1 // loop_exit
      _

</llo_original>
